<compile_context>
chip_gen: v6e
topology: v6e:2x2x1
jax: 0.10.0
libtpu: 0.0.40
codegen_flags: <defaults>
</compile_context>

<pallas_src>
import functools

import numpy as np
import jax
import jax.numpy as jnp
from jax.experimental import pallas as pl
from jax.experimental.pallas import tpu as pltpu


# ----------------------------------------------------------------------------
# Pallas kernel: per-row top-k mask (+ optional softmax marginals), fused output
# ----------------------------------------------------------------------------
def _rewire_kernel(counts_ref, logits_ref, out_ref, *, k, negate, with_marginals,
                   exact_ties):
    x = logits_ref[...]                                    # [TR, Np] f32
    if negate:
        x = -x                                             # deletion: top-k of -logits (fused)
    tr, n = x.shape
    col = jax.lax.broadcasted_iota(jnp.int32, (tr, n), 1)
    valid_b = col < counts_ref[...]                        # [TR,1] counts -> [TR,Np] mask
    valid = valid_b.astype(jnp.float32)

    # ---- deterministic top-k along the lane axis -----------------------------
    # Selection runs directly in f32: a max-reduce returns an exact input value,
    # so `==` re-identifies it.  Invalid slots pinned to -inf, so a single
    # `min(sel,1) * valid` at the end replaces per-iteration guards.
    neg_inf = jnp.float32(-jnp.inf)
    work = jnp.where(valid_b, x, neg_inf)

    row_max0 = jnp.max(work, axis=-1, keepdims=True)       # reused by the softmax below
    row_max = row_max0
    sel = jnp.zeros((tr, n), jnp.float32)
    for i in range(k):                                     # k small & static -> unrolled
        is_max = work == row_max
        if exact_ties:
            # torch.topk parity on exact f32 ties: extra XLU reduce picks lowest column
            first_idx = jnp.min(jnp.where(is_max, col, n), axis=-1, keepdims=True)
            pick = jnp.logical_and(is_max, col == first_idx)
        else:
            # 1 XLU reduce / iteration; exact f32 ties may select a few extra slots
            pick = is_max
        sel = sel + pick.astype(jnp.float32)
        work = jnp.where(pick, neg_inf, work)
        if i + 1 < k:
            row_max = jnp.max(work, axis=-1, keepdims=True)
    sel = jnp.minimum(sel, 1.0) * valid                    # rows with count < k keep all valid

    if with_marginals:
        # softmax marginals over valid slots; reuse iteration-0 row max
        m = jnp.where(row_max0 == neg_inf, jnp.float32(0.0), row_max0)   # guard empty rows
        e = jnp.where(valid_b, jnp.exp(x - m), jnp.float32(0.0))
        denom = jnp.maximum(jnp.sum(e, axis=-1, keepdims=True), jnp.float32(1e-20))
        out_ref[...] = e * sel * (jnp.float32(1.0) / denom)   # exact per-row reciprocal
    else:
        out_ref[...] = 1.0 - sel                               # deletion weights


# ----------------------------------------------------------------------------
# Tile sizing (VMEM model) + pallas_call wrapper
# ----------------------------------------------------------------------------
def _round_up(v, m):
    return -(-v // m) * m


@functools.lru_cache(maxsize=1)
def _vmem_limit_bytes():
    """Per-generation scoped VMEM budget: ~38 MiB on v7x (64 MiB/TC), 64 MiB on v5e/v6e."""
    cap = None
    try:
        cap = getattr(pltpu.get_tpu_info(), "vmem_capacity_bytes", None)
    except Exception:
        cap = None
    if not cap or cap <= 0:
        cap = 64 * 1024 * 1024                      # conservative default (v7x per-core VMEM)
    return int(min(int(cap) * 6 // 10, 64 * 1024 * 1024))


def _tile_rows(num_rows, n_padded, min_grid=4):
    """Row tile sized by live VMEM bytes, not just the I/O buffers.

    Per grid step roughly 12 f32 tiles are live: 2x double-buffered input +
    output blocks plus ~8 temporaries kept alive by the cross-lane reductions
    (x, work, sel, masks, exp, ...).  The tile is also capped so the row grid
    keeps >= `min_grid` steps, letting dimension_semantics=("parallel",) shard
    rows across both v7x TensorCores and keeping the DMA pipeline busy.
    """
    num_rows = max(int(num_rows), 1)
    limit = _vmem_limit_bytes()
    row_bytes = n_padded * 4
    tile_r = max(8, ((limit // 16) // row_bytes) // 8 * 8)     # ~limit/16 bytes of logits/tile
    rows8 = _round_up(num_rows, 8)
    grid_cap = max(8, _round_up(-(-num_rows // min_grid), 8))  # keep >= min_grid grid steps
    tile_r = min(tile_r, rows8, grid_cap)
    padded_rows = _round_up(num_rows, tile_r)
    return tile_r, padded_rows


def _topk_rewire_padded(logits_pad, counts_pad, tile_r, k, *, negate,
                        with_marginals, exact_ties=False):
    """Fused top-k / marginal kernel over a pre-padded [Rp, Np] tile; returns padded output."""
    Rp, Np = logits_pad.shape
    kern = functools.partial(_rewire_kernel, k=int(k), negate=bool(negate),
                             with_marginals=bool(with_marginals),
                             exact_ties=bool(exact_ties))
    return pl.pallas_call(
        kern,
        grid=(Rp // tile_r,),
        in_specs=[pl.BlockSpec((tile_r, 1), lambda i: (i, 0)),      # per-row valid counts
                  pl.BlockSpec((tile_r, Np), lambda i: (i, 0))],    # logits tile
        out_specs=pl.BlockSpec((tile_r, Np), lambda i: (i, 0)),
        out_shape=jax.ShapeDtypeStruct((Rp, Np), jnp.float32),
        compiler_params=pltpu.CompilerParams(
            dimension_semantics=("parallel",),                      # megacore-shard rows (v7x)
            vmem_limit_bytes=_vmem_limit_bytes()),
    )(counts_pad, logits_pad)


def topk_rewire(logits2d, counts_rows, k, *, negate=False, with_marginals=False,
                exact_ties=False):
    """Convenience wrapper over a ragged-valid [R, N] tile (pads, runs kernel, slices)."""
    logits2d = jnp.asarray(logits2d, jnp.float32)
    R, N = logits2d.shape
    Np = _round_up(N, 128)
    tile_r, Rp = _tile_rows(R, Np)
    lp = jnp.zeros((Rp, Np), jnp.float32).at[:R, :N].set(logits2d)
    cnt = np.zeros((Rp, 1), np.int32)
    cnt[:R, 0] = np.asarray(counts_rows, np.int32)
    out = _topk_rewire_padded(lp, jnp.asarray(cnt), tile_r, k, negate=negate,
                              with_marginals=with_marginals, exact_ties=exact_ties)
    return out[:R, :N]


# ----------------------------------------------------------------------------
# Static (per-count-tuple) index / counts caches
# ----------------------------------------------------------------------------
@functools.lru_cache(maxsize=64)
def _scatter_indices(counts_tuple, ens):
    """Row/col indices mapping flat [C, E] logits into the [B*E, Nmax] kernel layout."""
    counts = list(counts_tuple)
    B = len(counts)
    rows = np.repeat(np.arange(B, dtype=np.int64), counts)
    cols = (np.concatenate([np.arange(c, dtype=np.int64) for c in counts])
            if sum(counts) else np.zeros((0,), np.int64))
    ridx = rows[:, None] * ens + np.arange(ens, dtype=np.int64)[None, :]     # [C, E]
    cidx = np.ascontiguousarray(np.broadcast_to(cols[:, None], ridx.shape))  # [C, E]
    return ridx, cidx


@functools.lru_cache(maxsize=64)
def _padded_counts(counts_tuple, ens, padded_rows):
    """Padded per-row valid counts (row = graph*E + head), cached on device."""
    c = np.zeros((padded_rows, 1), np.int32)
    c[: len(counts_tuple) * ens, 0] = np.repeat(np.asarray(counts_tuple, np.int32), ens)
    return jnp.asarray(c)


@functools.lru_cache(maxsize=64)
def _undirected_dup_indices(dir_counts_tuple):
    offs = np.concatenate([[0], np.cumsum(dir_counts_tuple)]).astype(np.int64)
    return np.concatenate(
        [np.tile(np.arange(offs[g], offs[g + 1]), 2) for g in range(len(dir_counts_tuple))])


# ----------------------------------------------------------------------------
# Plain-JAX glue reproducing GraphRewirer.forward (eval / validation path)
# ----------------------------------------------------------------------------
class GraphRewirerPallas:
    """Eval-mode GraphRewirer (separate=False, data_list_compatible=False)."""

    def __init__(self, add_k, del_k, val_ensemble, directed_sampling=False,
                 exact_topk_ties=False):
        assert add_k > 0 and del_k > 0   # TODO(synk): add-only / del-only "separate" branches
        self.add_k = add_k
        self.del_k = del_k
        self.val_ensemble = val_ensemble
        self.directed_sampling = directed_sampling
        self.exact_topk_ties = exact_topk_ties   # exact torch.topk tie parity costs 2x XLU reduces

    # ---- add_edge -----------------------------------------------------------
    def add_edge(self, addition_logits, edge_candidate_idx, cand_counts, num_nodes):
        E, VE = addition_logits.shape[-1], self.val_ensemble
        B, Nmax = len(cand_counts), max(cand_counts)
        counts_t = tuple(int(c) for c in cand_counts)
        Np = _round_up(Nmax, 128)
        tile_r, Rp = _tile_rows(B * E, Np)

        ridx, cidx = _scatter_indices(counts_t, E)
        logits_pad = jnp.zeros((Rp, Np), jnp.float32).at[ridx, cidx].set(
            addition_logits.astype(jnp.float32))                    # single scatter into kernel layout
        cnt = _padded_counts(counts_t, E, Rp)

        # TODO(synk): exact EdgeSIMPLEBatched.validation marginals are not
        # reproducible without its source; surrogate = top-k mask * softmax marginals.
        out_pad = _topk_rewire_padded(logits_pad, cnt, tile_r, self.add_k,
                                      negate=False, with_marginals=True,
                                      exact_ties=self.exact_topk_ties)
        w = out_pad[ridx, cidx]                                      # [C, E], padding never read
        C = w.shape[0]
        w = jnp.broadcast_to(w[:, :, None], (C, E, VE)).reshape(C, E * VE)   # [C, E*VE]

        add_ei = edge_candidate_idx.T                                # [2, C]
        if not self.directed_sampling:
            # TODO(synk): torch_geometric.to_undirected also coalesces/sorts; here we
            # mirror edges and duplicate weights (same multiset, different order).
            add_ei = jnp.concatenate([add_ei, add_ei[::-1]], axis=1)
            w = jnp.concatenate([w, w], axis=0)

        reps = E * VE
        offs = jnp.arange(reps, dtype=add_ei.dtype) * num_nodes
        add_ei = (add_ei[:, None, :] + offs[None, :, None]).reshape(2, -1)   # one bcast add
        add_w = w.T.reshape(-1)
        return add_w, add_ei, 0.0                                    # auxloss=0 in eval

    # ---- del_edge -----------------------------------------------------------
    def del_edge(self, deletion_logits, dir_counts, num_nodes):
        E, VE = deletion_logits.shape[-1], self.val_ensemble
        B, Nmax = len(dir_counts), max(dir_counts)
        counts_t = tuple(int(c) for c in dir_counts)
        Np = _round_up(Nmax, 128)
        tile_r, Rp = _tile_rows(B * E, Np)

        ridx, cidx = _scatter_indices(counts_t, E)
        logits_pad = jnp.zeros((Rp, Np), jnp.float32).at[ridx, cidx].set(
            deletion_logits.astype(jnp.float32))
        cnt = _padded_counts(counts_t, E, Rp)

        # fused: 1 - top-del_k mask of the negated logits (no marginals computed)
        out_pad = _topk_rewire_padded(logits_pad, cnt, tile_r, self.del_k,
                                      negate=True, with_marginals=False,
                                      exact_ties=self.exact_topk_ties)
        w = out_pad[ridx, cidx]                                      # [Cdir, E]
        Cd = w.shape[0]
        w = jnp.broadcast_to(w[:, :, None], (Cd, E, VE)).reshape(Cd, E * VE)

        if not self.directed_sampling:
            # to_undirected(reduce='mean') over one value per direction == duplicate.
            # TODO(synk): assumes per-graph edge order [directed, reversed]; the
            # reference relies on the batch edge_index being coalesced instead.
            w = w[_undirected_dup_indices(counts_t)]                 # [E_tot, E*VE]
        del_w = w.T.reshape(-1)
        return del_w, 0.0

    # ---- forward ------------------------------------------------------------
    def __call__(self, edge_index, num_nodes, addition_logits, deletion_logits,
                 edge_candidate_idx, cand_counts, dir_counts):
        E, VE = addition_logits.shape[-1], self.val_ensemble
        add_w, add_ei, aux1 = self.add_edge(addition_logits, edge_candidate_idx,
                                            cand_counts, num_nodes)
        del_w, aux2 = self.del_edge(deletion_logits, dir_counts, num_nodes)

        reps = E * VE
        offs = jnp.arange(reps, dtype=edge_index.dtype) * num_nodes
        dumb_repeat_ei = (edge_index[:, None, :] + offs[None, :, None]).reshape(2, -1)

        # merge_del_add (separate=False, data_list_compatible=False):
        merged_edge_index = jnp.concatenate([dumb_repeat_ei, add_ei], axis=1)
        merged_edge_weight = jnp.concatenate([del_w, add_w], axis=0)
        # TODO(synk): Batch/_slice_dict bookkeeping and sparsify_edge_weight_simplified
        # (graph-object mutation) have no array-level Pallas equivalent.
        return merged_edge_index, merged_edge_weight, aux1 + aux2


# ----------------------------------------------------------------------------
# Synthetic example + numerical check against a numpy reference
# ----------------------------------------------------------------------------
if __name__ == "__main__":
    # two graphs, 8 nodes each (global node ids 0..7 and 8..15)
    num_nodes = 16
    g0_dir = np.array([[0, 1, 2, 0], [1, 2, 3, 3]])                 # 4 directed edges
    g1_dir = np.array([[0, 1, 0, 3, 4], [1, 2, 2, 4, 5]]) + 8       # 5 directed edges
    # per-graph edge order = [directed, reversed]  (undirected graph)
    edge_index = jnp.asarray(np.concatenate(
        [g0_dir, g0_dir[::-1], g1_dir, g1_dir[::-1]], axis=1), dtype=jnp.int32)  # [2, 18]
    dir_counts = [4, 5]

    # edge-addition candidates (global node-id pairs), 6 for graph0, 8 for graph1
    edge_candidate_idx = jnp.asarray(np.array(
        [[0, 2], [0, 4], [1, 3], [2, 5], [3, 6], [4, 7],
         [8, 11], [8, 12], [9, 13], [9, 14], [10, 14], [10, 15], [11, 13], [12, 15]],
        dtype=np.int32))                                            # [14, 2]
    cand_counts = [6, 8]

    E, VE = 2, 2
    key = jax.random.PRNGKey(0)
    k1, k2 = jax.random.split(key)
    addition_logits = jax.random.normal(k1, (sum(cand_counts), E), jnp.float32)  # [14, 2]
    deletion_logits = jax.random.normal(k2, (sum(dir_counts), E), jnp.float32)   # [9, 2]

    rewirer = GraphRewirerPallas(add_k=2, del_k=1, val_ensemble=VE,
                                 directed_sampling=False)
    merged_ei, merged_w, auxloss = rewirer(edge_index, num_nodes,
                                           addition_logits, deletion_logits,
                                           edge_candidate_idx, cand_counts, dir_counts)
    jax.block_until_ready((merged_ei, merged_w))

    # sanity: 18 original edges * (E*VE=4) reps  +  2*14 undirected candidates * 4 reps
    assert merged_ei.shape == (2, 18 * 4 + 28 * 4)
    assert merged_w.shape == (18 * 4 + 28 * 4,)
    assert float(auxloss) == 0.0

    # standalone kernel check vs numpy reference (ragged counts, both variants)
    Rchk, Nchk, k_chk = 16, 200, 3
    k3, k4 = jax.random.split(jax.random.PRNGKey(1))
    chk_logits = jax.random.normal(k3, (Rchk, Nchk), jnp.float32)
    chk_counts = np.asarray(jax.random.randint(k4, (Rchk,), 1, Nchk + 1))
    got_add = np.asarray(topk_rewire(chk_logits, chk_counts, k_chk,
                                     negate=False, with_marginals=True))
    got_del = np.asarray(topk_rewire(chk_logits, chk_counts, k_chk,
                                     negate=True, with_marginals=False))
    got_del_exact = np.asarray(topk_rewire(chk_logits, chk_counts, k_chk,
                                           negate=True, with_marginals=False,
                                           exact_ties=True))
    # fast (1-reduce/iter) and exact-tie paths agree when no exact f32 ties exist
    np.testing.assert_array_equal(got_del, got_del_exact)

    ref = np.asarray(chk_logits, np.float64)
    for r in range(Rchk):
        c = int(chk_counts[r]); kk = min(k_chk, c)
        xr = ref[r, :c]
        sel = np.zeros(Nchk); sel[np.argsort(-xr, kind="stable")[:kk]] = 1.0
        e = np.exp(xr - xr.max())
        marg = np.zeros(Nchk); marg[:c] = e / e.sum()
        np.testing.assert_allclose(got_add[r], marg * sel, rtol=1e-2, atol=1e-6)
        sel_n = np.zeros(Nchk); sel_n[np.argsort(xr, kind="stable")[:kk]] = 1.0
        np.testing.assert_allclose(got_del[r, :c], (1.0 - sel_n)[:c], atol=0)

    print("KERNEL_OK")
</pallas_src>

<mosaic_0001>
module attributes {stable_mosaic.version = 11 : i64} {
  func.func @_rewire_kernel(%arg0: i32, %arg1: memref<8x1xi32, #tpu.memory_space<vmem>>, %arg2: memref<8x128xf32, #tpu.memory_space<vmem>>, %arg3: memref<8x128xf32, #tpu.memory_space<vmem>>) attributes {dimension_semantics = [#tpu.dimension_semantics<parallel>], iteration_bounds = array<i64: 1>, scalar_prefetch = 0 : i64, scratch_operands = 0 : i64, tpu.core_type = #tpu.core_type<tc>, window_params = [{transform_indices = @transform_0, window_bounds = array<i64: 8, 1>}, {transform_indices = @transform_1, window_bounds = array<i64: 8, 128>}, {transform_indices = @transform_2, window_bounds = array<i64: 8, 128>}]} {
    %c0 = arith.constant 0 : index
    %c0_0 = arith.constant 0 : index
    %0 = vector.load %arg2[%c0, %c0_0] : memref<8x128xf32, #tpu.memory_space<vmem>>, vector<8x128xf32>
    %1 = tpu.iota {dimensions = array<i32: 1>} : vector<8x128xi32>
    %c0_1 = arith.constant 0 : index
    %c0_2 = arith.constant 0 : index
    %2 = vector.load %arg1[%c0_1, %c0_2] : memref<8x1xi32, #tpu.memory_space<vmem>>, vector<8x1xi32>
    %3 = vector.broadcast %2 : vector<8x1xi32> to vector<8x128xi32>
    %4 = arith.cmpi slt, %1, %3 : vector<8x128xi32>
    %5 = arith.extui %4 : vector<8x128xi1> to vector<8x128xi32>
    %6 = arith.sitofp %5 : vector<8x128xi32> to vector<8x128xf32>
    %cst = arith.constant 0xFF800000 : f32
    %7 = vector.broadcast %cst : f32 to vector<8x128xf32>
    %8 = arith.select %4, %0, %7 : vector<8x128xi1>, vector<8x128xf32>
    %cst_3 = arith.constant dense<0xFF800000> : vector<8xf32>
    %9 = vector.multi_reduction <maximumf>, %8, %cst_3 [1] : vector<8x128xf32> to vector<8xf32>
    %10 = vector.shape_cast %9 : vector<8xf32> to vector<8x1xf32>
    %cst_4 = arith.constant 0.000000e+00 : f32
    %11 = vector.broadcast %cst_4 : f32 to vector<8x128xf32>
    %12 = vector.broadcast %10 : vector<8x1xf32> to vector<8x128xf32>
    %13 = arith.cmpf oeq, %8, %12 : vector<8x128xf32>
    %14 = arith.extui %13 : vector<8x128xi1> to vector<8x128xi32>
    %15 = arith.sitofp %14 : vector<8x128xi32> to vector<8x128xf32>
    %16 = arith.addf %11, %15 : vector<8x128xf32>
    %cst_5 = arith.constant 0xFF800000 : f32
    %17 = vector.broadcast %cst_5 : f32 to vector<8x128xf32>
    %18 = arith.select %13, %17, %8 : vector<8x128xi1>, vector<8x128xf32>
    %cst_6 = arith.constant dense<0xFF800000> : vector<8xf32>
    %19 = vector.multi_reduction <maximumf>, %18, %cst_6 [1] : vector<8x128xf32> to vector<8xf32>
    %20 = vector.shape_cast %19 : vector<8xf32> to vector<8x1xf32>
    %21 = vector.broadcast %20 : vector<8x1xf32> to vector<8x128xf32>
    %22 = arith.cmpf oeq, %18, %21 : vector<8x128xf32>
    %23 = arith.extui %22 : vector<8x128xi1> to vector<8x128xi32>
    %24 = arith.sitofp %23 : vector<8x128xi32> to vector<8x128xf32>
    %25 = arith.addf %16, %24 : vector<8x128xf32>
    %cst_7 = arith.constant 1.000000e+00 : f32
    %26 = vector.broadcast %cst_7 : f32 to vector<8x128xf32>
    %27 = arith.minimumf %25, %26 : vector<8x128xf32>
    %28 = arith.mulf %27, %6 : vector<8x128xf32>
    %cst_8 = arith.constant 0xFF800000 : f32
    %29 = vector.broadcast %cst_8 : f32 to vector<8x1xf32>
    %30 = arith.cmpf oeq, %10, %29 : vector<8x1xf32>
    %cst_9 = arith.constant 0.000000e+00 : f32
    %31 = vector.broadcast %cst_9 : f32 to vector<8x1xf32>
    %32 = arith.select %30, %31, %10 : vector<8x1xi1>, vector<8x1xf32>
    %33 = vector.broadcast %32 : vector<8x1xf32> to vector<8x128xf32>
    %34 = arith.subf %0, %33 : vector<8x128xf32>
    %35 = math.exp %34 : vector<8x128xf32>
    %cst_10 = arith.constant 0.000000e+00 : f32
    %36 = vector.broadcast %cst_10 : f32 to vector<8x128xf32>
    %37 = arith.select %4, %35, %36 : vector<8x128xi1>, vector<8x128xf32>
    %cst_11 = arith.constant dense<0.000000e+00> : vector<8xf32>
    %38 = vector.multi_reduction <add>, %37, %cst_11 [1] : vector<8x128xf32> to vector<8xf32>
    %39 = vector.shape_cast %38 : vector<8xf32> to vector<8x1xf32>
    %cst_12 = arith.constant 9.99999968E-21 : f32
    %40 = vector.broadcast %cst_12 : f32 to vector<8x1xf32>
    %41 = arith.maximumf %39, %40 : vector<8x1xf32>
    %42 = arith.mulf %37, %28 : vector<8x128xf32>
    %cst_13 = arith.constant 1.000000e+00 : f32
    %43 = vector.broadcast %cst_13 : f32 to vector<8x1xf32>
    %44 = arith.divf %43, %41 : vector<8x1xf32>
    %45 = vector.broadcast %44 : vector<8x1xf32> to vector<8x128xf32>
    %46 = arith.mulf %42, %45 : vector<8x128xf32>
    %c0_14 = arith.constant 0 : index
    %c0_15 = arith.constant 0 : index
    %47 = vector.load %arg3[%c0_14, %c0_15] : memref<8x128xf32, #tpu.memory_space<vmem>>, vector<8x128xf32>
    tpu.vector_store %arg3[%c0_14, %c0_15], %46 {strides = array<i32>} : memref<8x128xf32, #tpu.memory_space<vmem>>, vector<8x128xf32>,
    return
  }
  func.func @transform_0(%arg0: i32) -> (i32, i32) {
    %c0_i32 = arith.constant 0 : i32
    %c0_i32_0 = arith.constant 0 : i32
    return %arg0, %c0_i32 : i32, i32
  }
  func.func @transform_1(%arg0: i32) -> (i32, i32) {
    %c0_i32 = arith.constant 0 : i32
    %c0_i32_0 = arith.constant 0 : i32
    return %arg0, %c0_i32 : i32, i32
  }
  func.func @transform_2(%arg0: i32) -> (i32, i32) {
    %c0_i32 = arith.constant 0 : i32
    %c0_i32_0 = arith.constant 0 : i32
    return %arg0, %c0_i32 : i32, i32
  }
}

</mosaic_0001>

<llo_original>
// kernel: tpu_custom_call.1
$region0: #{tpu_custom_call.1}
  #allocation0 [shape = 'u32[]', space=smem, size = 0x4, offset = 0x4, fixed_abs, tag = 'smem constant byte address 0x4 - core index']
  #allocation1 [shape = 'u32[144,128]{1,0:T(1,128)}', space=vmem, size = 0x12000, scoped, tag = 'internal scratch']
  %s0 = inlined_call_operand.vmem [shape: s32[8,1], index: 0, kind: input, shape index: {}]
  %s1 = inlined_call_operand.vmem [shape: f32[8,128], index: 1, kind: input, shape index: {}]
  %s2 = inlined_call_operand.hbm [shape: f32[8,128], index: 2, kind: output, shape index: {}]
  %s3 = sld [smem:[#allocation0]]
  $region18: #{tpu_custom_call.1} parent=0
    _
  %s5 = ssub.s32 1, %s3
  %s6 = scalar_select 0, %s5, %s3
  $region1: #{tpu_custom_call.1} parent=0
    #allocation2 [shape = 'u8[4096]{0}', space=vmem, size = 0x1000, scoped, tag = 'output window, operand 0, single buffered']
    #allocation3 [shape = 's32[1]{0}', space=sflag, size = 0x4, scoped, tag = 'scoped memory for tpu_custom_call.1']
    %7 = vsyncpa [#allocation3], 0
    // Predicated region
    $region2: #{tpu_custom_call.1} parent=1 // pred_check
      _
    $region3: #{tpu_custom_call.1} parent=1 // pred_check_branch
      %9 = sbr.rel (0) target = $region5
    $region4: #{tpu_custom_call.1} parent=1 // pred_region
      _
    $region5: #{tpu_custom_call.1} parent=1 // pred_fallthru
      _
    // Predicated region
    $region6: #{tpu_custom_call.1} parent=1 // pred_check
      _
    $region7: #{tpu_custom_call.1} parent=1 // pred_check_branch
      %11 = sbr.rel (0) target = $region9
    $region8: #{tpu_custom_call.1} parent=1 // pred_region
      _
    $region9: #{tpu_custom_call.1} parent=1 // pred_fallthru
      _
    %v12 = vld [vmem:[%s1] sm:$0xff]
    %v13 = vlaneseq
    %v14 = vand.u32 %v13, 127
    %v15 = vld [vmem:[%s0] sm:$0xff]
    %16 = vset.pattern.permute.xlu0 0
    %17 = vperm.xlu0 %16, %v15
    %v18 = vpop.permute.xlu0 %17
    %vm19 = vcmp.lt.s32.totalorder %v14, %v18
    %v20 = vsel %vm19, 1, 0
    %v21 = vcvt.s32.f32 %v20
    %v22 = vsel %vm19, %v12, -inf
    %23 = vmax.xlane.f32.xlu0 %v22
    %v24 = vpop.xlane.xlu0 %23
    %vm25 = vcmp.eq.f32.partialorder %v22, %v24
    %v26 = vsel %vm25, 1, 0
    %v27 = vcvt.s32.f32 %v26
    %v28 = vadd.f32 %v27, 0.0
    %v29 = vsel %vm25, -inf, %v22
    %30 = vmax.xlane.f32.xlu0 %v29
    %v31 = vpop.xlane.xlu0 %30
    %vm32 = vcmp.eq.f32.partialorder %v29, %v31
    %v33 = vsel %vm32, 1, 0
    %v34 = vcvt.s32.f32 %v33
    %v35 = vadd.f32 %v28, %v34
    %v36 = vmin.f32 %v35, 1.0
    %v37 = vmul.f32 %v36, %v21
    %vm38 = vcmp.eq.f32.partialorder %v24, -inf
    %v39 = vsel %vm38, 0.0, %v24
    %v40 = vsub.f32 %v12, %v39
    %v41 = vmul.f32 %v40, 1.442695
    %v42 = vpow.pop %v41
    %v43 = vsel %vm19, %v42, 0.0
    %44 = vadd.xlane.f32.xlu0 %v43
    %v45 = vpop.xlane.xlu0 %44
    %v46 = vmax.f32 %v45, 1e-20
    %v47 = vmul.f32 %v43, %v37
    %v48 = vrcp.pop %v46
    %v49 = vmul.f32 1.0, %v48
    %v50 = vmul.f32 %v47, %v49
    %51 = vst [vmem:[#allocation2] sm:$0xff] %v50
    // Predicated region
    $region10: #{tpu_custom_call.1} parent=1 // pred_check
      _
    $region11: #{tpu_custom_call.1} parent=1 // pred_check_branch
      %53 = sbr.rel (0) target = $region13
    $region12: #{tpu_custom_call.1} parent=1 // pred_region
      %s55 = ssub.s32 128, 128
      %56 = vsyncadd [#allocation3], %s55
      %s58 = sshll.u32 [#allocation2], 4
      %s59 = int_to_ptr.vmem [resolvable:$true] %s58
      %61 = dma.vmem_to_hbm [thread:$0]  %s59, 128, %s2, [#allocation3]
    $region13: #{tpu_custom_call.1} parent=1 // pred_fallthru
      _
    // Predicated region
    $region14: #{tpu_custom_call.1} parent=1 // pred_check
      _
    $region15: #{tpu_custom_call.1} parent=1 // pred_check_branch
      %63 = sbr.rel (0) target = $region17
    $region16: #{tpu_custom_call.1} parent=1 // pred_region
      %64 = dma.done [#allocation3], 128
    $region17: #{tpu_custom_call.1} parent=1 // pred_fallthru
      _
    %65 = vsyncpa [#allocation3], 1

</llo_original>
